<compile_context>
chip_gen: v7x
topology: tpu7x:2x2x1
jax: 0.10.0
libtpu: 0.0.40
codegen_flags: <defaults>
</compile_context>

<pallas_src>
import jax
import jax.numpy as jnp
from jax import lax
from jax.experimental import pallas as pl
from jax.experimental.pallas import tpu as pltpu

SUBLANES = 8


def _linear_kernel(x_ref, w_ref, b_ref, o_ref):
    # x: [tm, K], w: [K, N] (pre-transposed), b: [1, N] -> o: [tm, N]
    o_ref[...] = (
        jnp.dot(x_ref[...], w_ref[...],
                preferred_element_type=jnp.float32,
                precision=lax.Precision.HIGHEST)
        + b_ref[...]
    )


def prepare_params(weight, bias):
    """One-time layout prep (hoisted out of the per-call path).

    weight: [N, K] (PyTorch nn.Linear layout) -> w_t: [K, N] f32
    bias:   [N]                               -> b_row: [1, N] f32
    """
    w_t = weight.astype(jnp.float32).T
    b_row = bias.astype(jnp.float32).reshape(1, -1)
    return w_t, b_row


def tw_linear_fwd(x, w_t, b_row, *, tm=1024):
    """Forward of Tw_Linear: x @ w_t + b_row.

    x:     [M, K]  (K = 24)
    w_t:   [K, N]  (pre-transposed, N = 10)
    b_row: [1, N]
    returns [M, N] float32
    """
    x = x.astype(jnp.float32)
    m, k = x.shape
    n = w_t.shape[1]

    # Batch tile: multiple of 8 sublanes, big enough to amortize per-step
    # overhead, small enough that the grid keeps >= 2 steps (v7x megacore).
    half = pl.cdiv(m, 2)
    tm_eff = max(SUBLANES, min(tm, ((half + SUBLANES - 1) // SUBLANES) * SUBLANES))
    grid = (pl.cdiv(m, tm_eff),)

    flops = 2 * m * k * n + m * n
    bytes_accessed = 4 * (m * k + k * n + n + m * n)

    out = pl.pallas_call(
        _linear_kernel,
        out_shape=jax.ShapeDtypeStruct((m, n), jnp.float32),
        grid_spec=pltpu.PrefetchScalarGridSpec(
            num_scalar_prefetch=0,
            grid=grid,
            in_specs=[
                pl.BlockSpec((tm_eff, k), lambda i: (i, 0)),  # x batch tile
                pl.BlockSpec((k, n), lambda i: (0, 0)),       # whole weight
                pl.BlockSpec((1, n), lambda i: (0, 0)),       # bias row
            ],
            out_specs=pl.BlockSpec((tm_eff, n), lambda i: (i, 0)),
        ),
        compiler_params=pltpu.CompilerParams(
            dimension_semantics=("parallel",)),               # 2 TCs on v7x
        cost_estimate=pl.CostEstimate(
            flops=flops, transcendentals=0, bytes_accessed=bytes_accessed),
    )(x, w_t, b_row)

    return out


def tw_linear(x, weight, bias, *, tm=1024):
    """Convenience one-shot wrapper (prep + forward)."""
    w_t, b_row = prepare_params(weight, bias)
    return tw_linear_fwd(x, w_t, b_row, tm=tm)


def _ref(x, weight, bias):
    return x.astype(jnp.float32) @ weight.astype(jnp.float32).T + bias


if __name__ == "__main__":
    key = jax.random.PRNGKey(0)
    k_x, k_w, k_b = jax.random.split(key, 3)

    M, K, N = 256, 24, 10                       # nn.Linear(24, 10), small batch
    x = jax.random.normal(k_x, (M, K), jnp.float32)
    # PyTorch nn.Linear default init: U(-1/sqrt(K), 1/sqrt(K))
    bound = 1.0 / float(jnp.sqrt(jnp.float32(K)))
    weight = jax.random.uniform(k_w, (N, K), jnp.float32, -bound, bound)
    bias = jax.random.uniform(k_b, (N,), jnp.float32, -bound, bound)

    # hoisted one-time param prep, then a jitted forward (single pallas_call)
    w_t, b_row = prepare_params(weight, bias)
    fwd = jax.jit(tw_linear_fwd)

    out = fwd(x, w_t, b_row)
    out = jax.block_until_ready(out)
    assert out.shape == (M, N), out.shape

    ref = _ref(x, weight, bias)
    max_err = float(jnp.max(jnp.abs(out - ref)))
    assert jnp.allclose(out, ref, rtol=1e-4, atol=1e-4), (
        "pallas/reference mismatch, max abs err = " + str(max_err))

    print("KERNEL_OK")
</pallas_src>

<mosaic_0001>
module attributes {stable_mosaic.version = 11 : i64} {
  func.func @_linear_kernel(%arg0: i32, %arg1: memref<128x24xf32, #tpu.memory_space<vmem>>, %arg2: memref<24x10xf32, #tpu.memory_space<vmem>>, %arg3: memref<1x10xf32, #tpu.memory_space<vmem>>, %arg4: memref<128x10xf32, #tpu.memory_space<vmem>>) attributes {dimension_semantics = [#tpu.dimension_semantics<parallel>], iteration_bounds = array<i64: 2>, scalar_prefetch = 0 : i64, scratch_operands = 0 : i64, tpu.core_type = #tpu.core_type<tc>, window_params = [{transform_indices = @transform_0, window_bounds = array<i64: 128, 24>}, {pipeline_mode = #tpu.pipeline_mode<synchronous>, transform_indices = @transform_1, window_bounds = array<i64: 24, 10>}, {pipeline_mode = #tpu.pipeline_mode<synchronous>, transform_indices = @transform_2, window_bounds = array<i64: 1, 10>}, {transform_indices = @transform_3, window_bounds = array<i64: 128, 10>}]} {
    %c0 = arith.constant 0 : index
    %c0_0 = arith.constant 0 : index
    %0 = vector.load %arg1[%c0, %c0_0] : memref<128x24xf32, #tpu.memory_space<vmem>>, vector<128x24xf32>
    %c0_1 = arith.constant 0 : index
    %c0_2 = arith.constant 0 : index
    %1 = vector.load %arg2[%c0_1, %c0_2] : memref<24x10xf32, #tpu.memory_space<vmem>>, vector<24x10xf32>
    %cst = arith.constant dense<0.000000e+00> : vector<128x10xf32>
    %2 = tpu.matmul %0, %1, %cst {dimension_numbers = #tpu.dot_dimension_numbers<[1], [0], [0], [1], [0, 0, 1, 1], [], []>, precision = #tpu.contract_precision<fp32>} : vector<128x24xf32>, vector<24x10xf32>, vector<128x10xf32> -> vector<128x10xf32>
    %c0_3 = arith.constant 0 : index
    %c0_4 = arith.constant 0 : index
    %3 = vector.load %arg3[%c0_3, %c0_4] : memref<1x10xf32, #tpu.memory_space<vmem>>, vector<1x10xf32>
    %4 = vector.broadcast %3 : vector<1x10xf32> to vector<128x10xf32>
    %5 = arith.addf %2, %4 : vector<128x10xf32>
    %c0_5 = arith.constant 0 : index
    %c0_6 = arith.constant 0 : index
    %6 = vector.load %arg4[%c0_5, %c0_6] : memref<128x10xf32, #tpu.memory_space<vmem>>, vector<128x10xf32>
    tpu.vector_store %arg4[%c0_5, %c0_6], %5 {strides = array<i32>} : memref<128x10xf32, #tpu.memory_space<vmem>>, vector<128x10xf32>,
    return
  }
  func.func @transform_0(%arg0: i32) -> (i32, i32) {
    %c0_i32 = arith.constant 0 : i32
    %c0_i32_0 = arith.constant 0 : i32
    return %arg0, %c0_i32 : i32, i32
  }
  func.func @transform_1(%arg0: i32) -> (i32, i32) {
    %c0_i32 = arith.constant 0 : i32
    %c0_i32_0 = arith.constant 0 : i32
    %c0_i32_1 = arith.constant 0 : i32
    return %c0_i32, %c0_i32_0 : i32, i32
  }
  func.func @transform_2(%arg0: i32) -> (i32, i32) {
    %c0_i32 = arith.constant 0 : i32
    %c0_i32_0 = arith.constant 0 : i32
    %c0_i32_1 = arith.constant 0 : i32
    return %c0_i32, %c0_i32_0 : i32, i32
  }
  func.func @transform_3(%arg0: i32) -> (i32, i32) {
    %c0_i32 = arith.constant 0 : i32
    %c0_i32_0 = arith.constant 0 : i32
    return %arg0, %c0_i32 : i32, i32
  }
}

</mosaic_0001>

<llo_original>
// kernel: tw_linear_fwd.1
$region0: #{tw_linear_fwd.1}
  #allocation0 [shape = 'u32[]', space=smem, size = 0x4, offset = 0x4, fixed_abs, tag = 'smem constant byte address 0x4 - core index']
  #allocation1 [shape = 'u32[144,128]{1,0:T(1,128)}', space=vmem, size = 0x12000, scoped, tag = 'internal scratch']
  %s0 = inlined_call_operand.vmem [shape: f32[256,24], index: 0, kind: input, shape index: {}]
  %s1 = inlined_call_operand.vmem [shape: f32[24,10], index: 1, kind: input, shape index: {}]
  %s2 = inlined_call_operand.vmem [shape: f32[1,10], index: 2, kind: input, shape index: {}]
  %s3 = inlined_call_operand.vmem [shape: f32[256,10], index: 3, kind: output, shape index: {}]
  %s4 = sld [smem:[#allocation0]]
  $region45: #{tw_linear_fwd.1} parent=0
    _
  %s6 = ssub.s32 1, %s4
  %s7 = scalar_select 0, %s6, %s4
  loop: start=0, step=1, limit=4
  $region2: #{tw_linear_fwd.1} parent=0 // loop_pre_header
    _
  $region3: #{tw_linear_fwd.1} parent=0 // loop_header
    %s9 = sphi 0, %s13
    %p10 = scmp.ge.s32.totalorder %s9, 4
    %s19 = sphi 0, %s21
    %s22 = sphi 0, %s19
    %s23 = sphi 0, %s22
    %s39 = sphi 0, %s23
    %s43 = sphi 0, %s43
    %s45 = sphi 0, %s43
    %s46 = sphi 0, %s45
    %s60 = sphi 0, %s46
    %s64 = sphi 0, %s64
    %s66 = sphi 0, %s64
    %s67 = sphi 0, %s66
    %s81 = sphi 0, %s67
    %s87 = sphi 0, %s89
    %s90 = sphi 0, %s87
    %s91 = sphi 0, %s90
    %s107 = sphi 0, %s91
  $region4: #{tw_linear_fwd.1} parent=0 // loop_header_branch
    %12 = sbr.rel (%p10) target = $region8
  $region5: #{tw_linear_fwd.1} parent=0 // loop_body
    %s14 = ssub.s32 %s9, 1
    %s15 = ssub.s32 %s9, 2
    %s16 = sadd.s32 %s9, 1
    %s17 = ssub.s32 %s9, %s16
    %p18 = scmp.eq.s32.totalorder %s17, 0
    %s20 = sadd.s32 %s19, 1
    %s21 = scalar_select %p18, %s19, %s20
    %p24 = pneg %p18
    %p25 = scmp.eq.s32.totalorder %s9, 1
    %p26 = por %p24, %p25
    %p27 = scmp.ne.s32.totalorder %s19, %s22
    %p28 = scmp.eq.s32.totalorder %s9, 0
    %p29 = por %p27, %p28
    %p30 = scmp.ne.s32.totalorder %s19, %s22
    %p31 = scmp.eq.s32.totalorder %s14, 1
    %p32 = por %p30, %p31
    %p33 = scmp.ne.s32.totalorder %s22, %s23
    %p34 = scmp.eq.s32.totalorder %s14, 0
    %p35 = por %p33, %p34
    %p36 = scmp.ne.s32.totalorder %s22, %s23
    %p37 = scmp.eq.s32.totalorder %s15, 1
    %p38 = por %p36, %p37
    %p40 = scmp.ne.s32.totalorder %s23, %s39
    %p41 = scmp.eq.s32.totalorder %s15, 0
    %p42 = por %p40, %p41
    %s44 = sadd.s32 %s43, 1
    %p47 = scmp.eq.s32.totalorder %s9, 1
    %p48 = scmp.ne.s32.totalorder %s43, %s45
    %p49 = scmp.eq.s32.totalorder %s9, 0
    %p50 = por %p48, %p49
    %p51 = scmp.ne.s32.totalorder %s43, %s45
    %p52 = scmp.eq.s32.totalorder %s14, 1
    %p53 = por %p51, %p52
    %p54 = scmp.ne.s32.totalorder %s45, %s46
    %p55 = scmp.eq.s32.totalorder %s14, 0
    %p56 = por %p54, %p55
    %p57 = scmp.ne.s32.totalorder %s45, %s46
    %p58 = scmp.eq.s32.totalorder %s15, 1
    %p59 = por %p57, %p58
    %p61 = scmp.ne.s32.totalorder %s46, %s60
    %p62 = scmp.eq.s32.totalorder %s15, 0
    %p63 = por %p61, %p62
    %s65 = sadd.s32 %s64, 1
    %p68 = scmp.eq.s32.totalorder %s9, 1
    %p69 = scmp.ne.s32.totalorder %s64, %s66
    %p70 = scmp.eq.s32.totalorder %s9, 0
    %p71 = por %p69, %p70
    %p72 = scmp.ne.s32.totalorder %s64, %s66
    %p73 = scmp.eq.s32.totalorder %s14, 1
    %p74 = por %p72, %p73
    %p75 = scmp.ne.s32.totalorder %s66, %s67
    %p76 = scmp.eq.s32.totalorder %s14, 0
    %p77 = por %p75, %p76
    %p78 = scmp.ne.s32.totalorder %s66, %s67
    %p79 = scmp.eq.s32.totalorder %s15, 1
    %p80 = por %p78, %p79
    %p82 = scmp.ne.s32.totalorder %s67, %s81
    %p83 = scmp.eq.s32.totalorder %s15, 0
    %p84 = por %p82, %p83
    %s85 = ssub.s32 %s9, %s16
    %p86 = scmp.eq.s32.totalorder %s85, 0
    %s88 = sadd.s32 %s87, 1
    %s89 = scalar_select %p86, %s87, %s88
    %p92 = pneg %p86
    %p93 = scmp.eq.s32.totalorder %s9, 1
    %p94 = por %p92, %p93
    %p95 = scmp.ne.s32.totalorder %s87, %s90
    %p96 = scmp.eq.s32.totalorder %s9, 0
    %p97 = por %p95, %p96
    %p98 = scmp.ne.s32.totalorder %s87, %s90
    %p99 = scmp.eq.s32.totalorder %s14, 1
    %p100 = por %p98, %p99
    %p101 = scmp.ne.s32.totalorder %s90, %s91
    %p102 = scmp.eq.s32.totalorder %s14, 0
    %p103 = por %p101, %p102
    %p104 = scmp.ne.s32.totalorder %s90, %s91
    %p105 = scmp.eq.s32.totalorder %s15, 1
    %p106 = por %p104, %p105
    %p108 = scmp.ne.s32.totalorder %s91, %s107
    %p109 = scmp.eq.s32.totalorder %s15, 0
    %p110 = por %p108, %p109
    %p111 = scmp.le.s32.totalorder 1, %s9
    %p112 = scmp.lt.s32.totalorder %s9, 3
    %p113 = pnand %p111, %p112
    %p114 = pneg %p113
    // Predicated region
    $region9: #{tw_linear_fwd.1} parent=5 // pred_check
      _
    $region10: #{tw_linear_fwd.1} parent=5 // pred_check_branch
      %116 = sbr.rel (%p113) target = $region12
    $region11: #{tw_linear_fwd.1} parent=5 // pred_region
      %s117 = ssub.s32 %s9, 1
      // Predicated region
      $region13: #{tw_linear_fwd.1} parent=11 // pred_check
        %p118 = pneg %p56
      $region14: #{tw_linear_fwd.1} parent=11 // pred_check_branch
        %120 = sbr.rel (%p118) target = $region16
      $region15: #{tw_linear_fwd.1} parent=11 // pred_region
        _
      $region16: #{tw_linear_fwd.1} parent=11 // pred_fallthru
        _
      // Predicated region
      $region17: #{tw_linear_fwd.1} parent=11 // pred_check
        %p121 = pneg %p77
      $region18: #{tw_linear_fwd.1} parent=11 // pred_check_branch
        %123 = sbr.rel (%p121) target = $region20
      $region19: #{tw_linear_fwd.1} parent=11 // pred_region
        _
      $region20: #{tw_linear_fwd.1} parent=11 // pred_fallthru
        _
    $region12: #{tw_linear_fwd.1} parent=5 // pred_fallthru
      _
    %p124 = scmp.lt.s32.totalorder %s9, 2
    // Predicated region
    $region21: #{tw_linear_fwd.1} parent=5 // pred_check
      %p125 = pneg %p124
    $region22: #{tw_linear_fwd.1} parent=5 // pred_check_branch
      %127 = sbr.rel (%p125) target = $region24
    $region23: #{tw_linear_fwd.1} parent=5 // pred_region
      // Predicated region
      $region25: #{tw_linear_fwd.1} parent=23 // pred_check
        %p128 = pneg %p29
      $region26: #{tw_linear_fwd.1} parent=23 // pred_check_branch
        %130 = sbr.rel (%p128) target = $region28
      $region27: #{tw_linear_fwd.1} parent=23 // pred_region
        %s131 = smul.u32 16, %s9
        %p132 = scmp.lt.s32.totalorder %s131, 31
        %s133 = scalar_select %p132, %s131, 31
        %s134 = smul.addr %s133, 8
        %s135 = scalar_lea.vmem %s0, %s134
        %s136 = smul.u32 16, %s9
      $region28: #{tw_linear_fwd.1} parent=23 // pred_fallthru
        _
    $region24: #{tw_linear_fwd.1} parent=5 // pred_fallthru
      _
    %p137 = scmp.le.s32.totalorder 1, %s9
    %p138 = scmp.lt.s32.totalorder %s9, 3
    %p139 = pnand %p137, %p138
    %p140 = pneg %p139
    // Predicated region
    $region29: #{tw_linear_fwd.1} parent=5 // pred_check
      _
    $region30: #{tw_linear_fwd.1} parent=5 // pred_check_branch
      %142 = sbr.rel (%p139) target = $region32
    $region31: #{tw_linear_fwd.1} parent=5 // pred_region
      %s143 = ssub.s32 %s9, 1
      %s144 = smul.u32 16, %s14
      %p145 = scmp.lt.s32.totalorder %s144, 31
      %s146 = scalar_select %p145, %s144, 31
      %s147 = smul.addr %s146, 8
      %s148 = scalar_lea.vmem %s0, %s147
      %p149 = pneg %p35
      %p150 = pneg %p32
      %p151 = pneg %p56
      %p152 = pneg %p53
      %p153 = pneg %p77
      %p154 = pneg %p74
      %p155 = pneg %p103
      %p156 = pneg %p100
      %s157 = smul.u32 16, %s14
      %p158 = scmp.lt.s32.totalorder %s157, 31
      %s159 = scalar_select %p158, %s157, 31
      %s160 = smul.addr %s159, 8
      %s161 = scalar_lea.vmem %s3, %s160
      %s162 = smul.u32 16, %s14
      %p163 = scmp.lt.s32.totalorder %s162, 31
      %s164 = scalar_select %p163, %s162, 31
      %s165 = smul.addr %s164, 8
      %s166 = scalar_lea.vmem %s0, %s165
      %s167 = smul.u32 16, %s14
      %s168 = smul.u32 16, %s14
      %p169 = scmp.lt.s32.totalorder %s168, 31
      %s170 = scalar_select %p169, %s168, 31
      %s171 = smul.addr %s170, 8
      %s172 = scalar_lea.vmem %s3, %s171
      %s173 = smul.u32 16, %s14
      %v174 = vld [vmem:[%s166] sm:$0xff]
      %v175 = vld [vmem:[%s166 + $0x8] sm:$0xff]
      %v176 = vld [vmem:[%s166 + $0x10] sm:$0xff]
      %v177 = vld [vmem:[%s166 + $0x18] sm:$0xff]
      %v178 = vld [vmem:[%s166 + $0x20] sm:$0xff]
      %v179 = vld [vmem:[%s166 + $0x28] sm:$0xff]
      %v180 = vld [vmem:[%s166 + $0x30] sm:$0xff]
      %v181 = vld [vmem:[%s166 + $0x38] sm:$0xff]
      %v182 = vld [vmem:[%s166 + $0x40] sm:$0xff]
      %v183 = vld [vmem:[%s166 + $0x48] sm:$0xff]
      %v184 = vld [vmem:[%s166 + $0x50] sm:$0xff]
      %v185 = vld [vmem:[%s166 + $0x58] sm:$0xff]
      %v186 = vld [vmem:[%s166 + $0x60] sm:$0xff]
      %v187 = vld [vmem:[%s166 + $0x68] sm:$0xff]
      %v188 = vld [vmem:[%s166 + $0x70] sm:$0xff]
      %v189 = vld [vmem:[%s166 + $0x78] sm:$0xff]
      %v190 = vld [vmem:[%s1] sm:$0xff]
      %v191 = vld [vmem:[%s1 + $0x8] sm:$0xff]
      %v192 = vld [vmem:[%s1 + $0x10] sm:$0xff]
      %v193 = vld [vmem:[%s2] sm:$0x1]
      %v195 = vlaneseq
      %v196 = vshrl.u32 %v195, 7
      %v197 = vsub.s32 0, %v196
      %v198 = vrot.slane %v193, %v197
      %vm200 = vcmask 195584
      %v202 = vsel %vm200, %v174, 0
      %v205 = vsel %vm200, %v175, 0
      %v208 = vsel %vm200, %v176, 0
      %v211 = vsel %vm200, %v177, 0
      %v214 = vsel %vm200, %v178, 0
      %v217 = vsel %vm200, %v179, 0
      %v220 = vsel %vm200, %v180, 0
      %v223 = vsel %vm200, %v181, 0
      %v226 = vsel %vm200, %v182, 0
      %v229 = vsel %vm200, %v183, 0
      %v232 = vsel %vm200, %v184, 0
      %v235 = vsel %vm200, %v185, 0
      %v238 = vsel %vm200, %v186, 0
      %v241 = vsel %vm200, %v187, 0
      %v244 = vsel %vm200, %v188, 0
      %v247 = vsel %vm200, %v189, 0
      %249 = vmatprep.subr.mxu0 0.0
      %v250 = vand.u32 %v190, 4294901760
      %251 = vmatpush1.msra.mxu0 %v250
      %252 = vmatprep.subr.mxu0 0.0
      %v253 = vand.u32 %v191, 4294901760
      %254 = vmatpush1.msra.mxu0 %v253
      %255 = vmatprep.subr.mxu0 0.0
      %v256 = vand.u32 %v192, 4294901760
      %257 = vmatpush1.msra.mxu0 %v256
      %258 = vmatprep.subr.mxu0 0.0
      %259 = vmatpush1.msra.mxu0 0.0
      %260 = vmatprep.subr.mxu0 0.0
      %261 = vmatpush1.msra.mxu0 0.0
      %262 = vmatprep.subr.mxu0 0.0
      %263 = vmatpush1.msra.mxu0 0.0
      %264 = vmatprep.subr.mxu0 0.0
      %265 = vmatpush1.msra.mxu0 0.0
      %266 = vmatprep.subr.mxu0 0.0
      %267 = vmatpush1.msra.mxu0 0.0
      %268 = vmatprep.subr.mxu0 0.0
      %269 = vmatpush1.msra.mxu0 0.0
      %270 = vmatprep.subr.mxu0 0.0
      %271 = vmatpush1.msra.mxu0 0.0
      %272 = vmatprep.subr.mxu0 0.0
      %273 = vmatpush1.msra.mxu0 0.0
      %274 = vmatprep.subr.mxu0 0.0
      %275 = vmatpush1.msra.mxu0 0.0
      %276 = vmatprep.subr.mxu0 0.0
      %277 = vmatpush1.msra.mxu0 0.0
      %278 = vmatprep.subr.mxu0 0.0
      %279 = vmatpush1.msra.mxu0 0.0
      %280 = vmatprep.subr.mxu0 0.0
      %281 = vmatpush1.msra.mxu0 0.0
      %282 = vmatprep.subr.mxu0 0.0
      %283 = vmatpush1.msra.mxu0 0.0
      %284 = vmatprep.subr.mxu0 0.0
      %285 = vmatpush1.msra.mxu0 0.0
      %286 = vmatprep.subr.mxu0 0.0
      %287 = vmatpush1.msra.mxu0 0.0
      %288 = vmatprep.subr.mxu0 0.0
      %289 = vmatpush1.msra.mxu0 0.0
      %290 = vmatprep.subr.mxu0 0.0
      %291 = vmatpush1.msra.mxu0 0.0
      %292 = vmatprep.subr.mxu0 0.0
      %293 = vmatpush1.msra.mxu0 0.0
      %294 = vmatprep.subr.mxu0 0.0
      %295 = vmatpush1.msra.mxu0 0.0
      %296 = vmatprep.subr.mxu0 0.0
      %297 = vmatpush1.msra.mxu0 0.0
      %298 = vmatprep.subr.mxu0 0.0
      %299 = vmatpush1.msra.mxu0 0.0
      %300 = vmatprep.subr.mxu0 0.0
      %301 = vmatpush1.msra.mxu0 0.0
      %302 = vmatprep.subr.mxu0 0.0
      %303 = vmatpush1.msra.mxu0 0.0
      %304 = vmatprep.subr.mxu0 0.0
      %305 = vmatpush1.msra.mxu0 0.0
      %306 = vmatprep.subr.mxu0 0.0
      %307 = vmatpush1.msra.mxu0 0.0
      %308 = vmatprep.subr.mxu0 0.0
      %309 = vmatpush1.msra.mxu0 0.0
      %310 = vmatprep.subr.mxu0 0.0
      %311 = vmatpush1.msra.mxu0 0.0
      %312 = vmatprep.subr.mxu0 0.0
      %313 = vmatpush1.msra.mxu0 0.0
      %314 = vmatprep.subr.mxu0 0.0
      %315 = vmatpush1.msra.mxu0 0.0
      %316 = vmatprep.mubr.f32.mxu0 0.0
      %v317 = vand.u32 %v202, 4294901760
      %v318 = vsub.f32 %v202, %v317
      %v319 = vand.u32 %v318, 4294901760
      %v320 = vsub.f32 %v318, %v319
      %v321 = vand.u32 %v320, 4294901760
      %322 = vmatmul.mubr.f32.gmra.mrb[0].mxu0 %v321
      %v323 = vpop.f32.mrb[0].mxu0
      %v324 = vadd.f32 %v198, %v323
      %v325 = vpop.f32.mrb[0].mxu0
      %326 = vmatprep.mubr.f32.mxu0 0.0
      %v327 = vand.u32 %v205, 4294901760
      %v328 = vsub.f32 %v205, %v327
      %v329 = vand.u32 %v328, 4294901760
      %v330 = vsub.f32 %v328, %v329
      %v331 = vand.u32 %v330, 4294901760
      %332 = vmatmul.mubr.f32.gmra.mrb[0].mxu0 %v331
      %v333 = vpop.f32.mrb[0].mxu0
      %v334 = vadd.f32 %v198, %v333
      %v335 = vpop.f32.mrb[0].mxu0
      %336 = vmatprep.mubr.f32.mxu0 0.0
      %v337 = vand.u32 %v208, 4294901760
      %v338 = vsub.f32 %v208, %v337
      %v339 = vand.u32 %v338, 4294901760
      %v340 = vsub.f32 %v338, %v339
      %v341 = vand.u32 %v340, 4294901760
      %342 = vmatmul.mubr.f32.gmra.mrb[0].mxu0 %v341
      %v343 = vpop.f32.mrb[0].mxu0
      %v344 = vadd.f32 %v198, %v343
      %v345 = vpop.f32.mrb[0].mxu0
      %346 = vmatprep.mubr.f32.mxu0 0.0
      %v347 = vand.u32 %v211, 4294901760
      %v348 = vsub.f32 %v211, %v347
      %v349 = vand.u32 %v348, 4294901760
      %v350 = vsub.f32 %v348, %v349
      %v351 = vand.u32 %v350, 4294901760
      %352 = vmatmul.mubr.f32.gmra.mrb[0].mxu0 %v351
      %v353 = vpop.f32.mrb[0].mxu0
      %v354 = vadd.f32 %v198, %v353
      %v355 = vpop.f32.mrb[0].mxu0
      %356 = vmatprep.mubr.f32.mxu0 0.0
      %v357 = vand.u32 %v214, 4294901760
      %v358 = vsub.f32 %v214, %v357
      %v359 = vand.u32 %v358, 4294901760
      %v360 = vsub.f32 %v358, %v359
      %v361 = vand.u32 %v360, 4294901760
      %362 = vmatmul.mubr.f32.gmra.mrb[0].mxu0 %v361
      %v363 = vpop.f32.mrb[0].mxu0
      %v364 = vadd.f32 %v198, %v363
      %v365 = vpop.f32.mrb[0].mxu0
      %366 = vmatprep.mubr.f32.mxu0 0.0
      %v367 = vand.u32 %v217, 4294901760
      %v368 = vsub.f32 %v217, %v367
      %v369 = vand.u32 %v368, 4294901760
      %v370 = vsub.f32 %v368, %v369
      %v371 = vand.u32 %v370, 4294901760
      %372 = vmatmul.mubr.f32.gmra.mrb[0].mxu0 %v371
      %v373 = vpop.f32.mrb[0].mxu0
      %v374 = vadd.f32 %v198, %v373
      %v375 = vpop.f32.mrb[0].mxu0
      %376 = vmatprep.mubr.f32.mxu0 0.0
      %v377 = vand.u32 %v220, 4294901760
      %v378 = vsub.f32 %v220, %v377
      %v379 = vand.u32 %v378, 4294901760
      %v380 = vsub.f32 %v378, %v379
      %v381 = vand.u32 %v380, 4294901760
      %382 = vmatmul.mubr.f32.gmra.mrb[0].mxu0 %v381
      %v383 = vpop.f32.mrb[0].mxu0
      %v384 = vadd.f32 %v198, %v383
      %v385 = vpop.f32.mrb[0].mxu0
      %386 = vmatprep.mubr.f32.mxu0 0.0
      %v387 = vand.u32 %v223, 4294901760
      %v388 = vsub.f32 %v223, %v387
      %v389 = vand.u32 %v388, 4294901760
      %v390 = vsub.f32 %v388, %v389
      %v391 = vand.u32 %v390, 4294901760
      %392 = vmatmul.mubr.f32.gmra.mrb[0].mxu0 %v391
      %v393 = vpop.f32.mrb[0].mxu0
      %v394 = vadd.f32 %v198, %v393
      %v395 = vpop.f32.mrb[0].mxu0
      %396 = vmatprep.mubr.f32.mxu0 0.0
      %v397 = vand.u32 %v226, 4294901760
      %v398 = vsub.f32 %v226, %v397
      %v399 = vand.u32 %v398, 4294901760
      %v400 = vsub.f32 %v398, %v399
      %v401 = vand.u32 %v400, 4294901760
      %402 = vmatmul.mubr.f32.gmra.mrb[0].mxu0 %v401
      %v403 = vpop.f32.mrb[0].mxu0
      %v404 = vadd.f32 %v198, %v403
      %v405 = vpop.f32.mrb[0].mxu0
      %406 = vmatprep.mubr.f32.mxu0 0.0
      %v407 = vand.u32 %v229, 4294901760
      %v408 = vsub.f32 %v229, %v407
      %v409 = vand.u32 %v408, 4294901760
      %v410 = vsub.f32 %v408, %v409
      %v411 = vand.u32 %v410, 4294901760
      %412 = vmatmul.mubr.f32.gmra.mrb[0].mxu0 %v411
      %v413 = vpop.f32.mrb[0].mxu0
      %v414 = vadd.f32 %v198, %v413
      %v415 = vpop.f32.mrb[0].mxu0
      %416 = vmatprep.mubr.f32.mxu0 0.0
      %v417 = vand.u32 %v232, 4294901760
      %v418 = vsub.f32 %v232, %v417
      %v419 = vand.u32 %v418, 4294901760
      %v420 = vsub.f32 %v418, %v419
      %v421 = vand.u32 %v420, 4294901760
      %422 = vmatmul.mubr.f32.gmra.mrb[0].mxu0 %v421
      %v423 = vpop.f32.mrb[0].mxu0
      %v424 = vadd.f32 %v198, %v423
      %v425 = vpop.f32.mrb[0].mxu0
      %426 = vmatprep.mubr.f32.mxu0 0.0
      %v427 = vand.u32 %v235, 4294901760
      %v428 = vsub.f32 %v235, %v427
      %v429 = vand.u32 %v428, 4294901760
      %v430 = vsub.f32 %v428, %v429
      %v431 = vand.u32 %v430, 4294901760
      %432 = vmatmul.mubr.f32.gmra.mrb[0].mxu0 %v431
      %v433 = vpop.f32.mrb[0].mxu0
      %v434 = vadd.f32 %v198, %v433
      %v435 = vpop.f32.mrb[0].mxu0
      %436 = vmatprep.mubr.f32.mxu0 0.0
      %v437 = vand.u32 %v238, 4294901760
      %v438 = vsub.f32 %v238, %v437
      %v439 = vand.u32 %v438, 4294901760
      %v440 = vsub.f32 %v438, %v439
      %v441 = vand.u32 %v440, 4294901760
      %442 = vmatmul.mubr.f32.gmra.mrb[0].mxu0 %v441
      %v443 = vpop.f32.mrb[0].mxu0
      %v444 = vadd.f32 %v198, %v443
      %v445 = vpop.f32.mrb[0].mxu0
      %446 = vmatprep.mubr.f32.mxu0 0.0
      %v447 = vand.u32 %v241, 4294901760
      %v448 = vsub.f32 %v241, %v447
      %v449 = vand.u32 %v448, 4294901760
      %v450 = vsub.f32 %v448, %v449
      %v451 = vand.u32 %v450, 4294901760
      %452 = vmatmul.mubr.f32.gmra.mrb[0].mxu0 %v451
      %v453 = vpop.f32.mrb[0].mxu0
      %v454 = vadd.f32 %v198, %v453
      %v455 = vpop.f32.mrb[0].mxu0
      %456 = vmatprep.mubr.f32.mxu0 0.0
      %v457 = vand.u32 %v244, 4294901760
      %v458 = vsub.f32 %v244, %v457
      %v459 = vand.u32 %v458, 4294901760
      %v460 = vsub.f32 %v458, %v459
      %v461 = vand.u32 %v460, 4294901760
      %462 = vmatmul.mubr.f32.gmra.mrb[0].mxu0 %v461
      %v463 = vpop.f32.mrb[0].mxu0
      %v464 = vadd.f32 %v198, %v463
      %v465 = vpop.f32.mrb[0].mxu0
      %466 = vmatprep.mubr.f32.mxu0 0.0
      %v467 = vand.u32 %v247, 4294901760
      %v468 = vsub.f32 %v247, %v467
      %v469 = vand.u32 %v468, 4294901760
      %v470 = vsub.f32 %v468, %v469
      %v471 = vand.u32 %v470, 4294901760
      %472 = vmatmul.mubr.f32.gmra.mrb[0].mxu0 %v471
      %v473 = vpop.f32.mrb[0].mxu0
      %v474 = vadd.f32 %v198, %v473
      %v475 = vpop.f32.mrb[0].mxu0
      %476 = vdwg.mxu0
      %477 = vmatprep.subr.mxu0 0.0
      %v478 = vand.u32 %v190, 4294901760
      %v479 = vsub.f32 %v190, %v478
      %v480 = vand.u32 %v479, 4294901760
      %v481 = vsub.f32 %v479, %v480
      %v482 = vand.u32 %v481, 4294901760
      %483 = vmatpush1.msra.mxu0 %v482
      %484 = vmatprep.subr.mxu0 0.0
      %v485 = vand.u32 %v191, 4294901760
      %v486 = vsub.f32 %v191, %v485
      %v487 = vand.u32 %v486, 4294901760
      %v488 = vsub.f32 %v486, %v487
      %v489 = vand.u32 %v488, 4294901760
      %490 = vmatpush1.msra.mxu0 %v489
      %491 = vmatprep.subr.mxu0 0.0
      %v492 = vand.u32 %v192, 4294901760
      %v493 = vsub.f32 %v192, %v492
      %v494 = vand.u32 %v493, 4294901760
      %v495 = vsub.f32 %v493, %v494
      %v496 = vand.u32 %v495, 4294901760
      %497 = vmatpush1.msra.mxu0 %v496
      %498 = vmatprep.subr.mxu0 0.0
      %499 = vmatpush1.msra.mxu0 0.0
      %500 = vmatprep.subr.mxu0 0.0
      %501 = vmatpush1.msra.mxu0 0.0
      %502 = vmatprep.subr.mxu0 0.0
      %503 = vmatpush1.msra.mxu0 0.0
      %504 = vmatprep.subr.mxu0 0.0
      %505 = vmatpush1.msra.mxu0 0.0
      %506 = vmatprep.subr.mxu0 0.0
      %507 = vmatpush1.msra.mxu0 0.0
      %508 = vmatprep.subr.mxu0 0.0
      %509 = vmatpush1.msra.mxu0 0.0
      %510 = vmatprep.subr.mxu0 0.0
      %511 = vmatpush1.msra.mxu0 0.0
      %512 = vmatprep.subr.mxu0 0.0
      %513 = vmatpush1.msra.mxu0 0.0
      %514 = vmatprep.subr.mxu0 0.0
      %515 = vmatpush1.msra.mxu0 0.0
      %516 = vmatprep.subr.mxu0 0.0
      %517 = vmatpush1.msra.mxu0 0.0
      %518 = vmatprep.subr.mxu0 0.0
      %519 = vmatpush1.msra.mxu0 0.0
      %520 = vmatprep.subr.mxu0 0.0
      %521 = vmatpush1.msra.mxu0 0.0
      %522 = vmatprep.subr.mxu0 0.0
      %523 = vmatpush1.msra.mxu0 0.0
      %524 = vmatprep.subr.mxu0 0.0
      %525 = vmatpush1.msra.mxu0 0.0
      %526 = vmatprep.subr.mxu0 0.0
      %527 = vmatpush1.msra.mxu0 0.0
      %528 = vmatprep.subr.mxu0 0.0
      %529 = vmatpush1.msra.mxu0 0.0
      %530 = vmatprep.subr.mxu0 0.0
      %531 = vmatpush1.msra.mxu0 0.0
      %532 = vmatprep.subr.mxu0 0.0
      %533 = vmatpush1.msra.mxu0 0.0
      %534 = vmatprep.subr.mxu0 0.0
      %535 = vmatpush1.msra.mxu0 0.0
      %536 = vmatprep.subr.mxu0 0.0
      %537 = vmatpush1.msra.mxu0 0.0
      %538 = vmatprep.subr.mxu0 0.0
      %539 = vmatpush1.msra.mxu0 0.0
      %540 = vmatprep.subr.mxu0 0.0
      %541 = vmatpush1.msra.mxu0 0.0
      %542 = vmatprep.subr.mxu0 0.0
      %543 = vmatpush1.msra.mxu0 0.0
      %544 = vmatprep.subr.mxu0 0.0
      %545 = vmatpush1.msra.mxu0 0.0
      %546 = vmatprep.subr.mxu0 0.0
      %547 = vmatpush1.msra.mxu0 0.0
      %548 = vmatprep.subr.mxu0 0.0
      %549 = vmatpush1.msra.mxu0 0.0
      %550 = vmatprep.subr.mxu0 0.0
      %551 = vmatpush1.msra.mxu0 0.0
      %552 = vmatprep.subr.mxu0 0.0
      %553 = vmatpush1.msra.mxu0 0.0
      %554 = vmatprep.subr.mxu0 0.0
      %555 = vmatpush1.msra.mxu0 0.0
      %556 = vmatprep.mubr.f32.mxu0 0.0
      %v557 = vand.u32 %v202, 4294901760
      %558 = vmatmul.mubr.f32.gmra.mrb[0].mxu0 %v557
      %v559 = vpop.f32.mrb[0].mxu0
      %v560 = vadd.f32 %v324, %v559
      %v561 = vpop.f32.mrb[0].mxu0
      %562 = vmatprep.mubr.f32.mxu0 0.0
      %v563 = vand.u32 %v205, 4294901760
      %564 = vmatmul.mubr.f32.gmra.mrb[0].mxu0 %v563
      %v565 = vpop.f32.mrb[0].mxu0
      %v566 = vadd.f32 %v334, %v565
      %v567 = vpop.f32.mrb[0].mxu0
      %568 = vmatprep.mubr.f32.mxu0 0.0
      %v569 = vand.u32 %v208, 4294901760
      %570 = vmatmul.mubr.f32.gmra.mrb[0].mxu0 %v569
      %v571 = vpop.f32.mrb[0].mxu0
      %v572 = vadd.f32 %v344, %v571
      %v573 = vpop.f32.mrb[0].mxu0
      %574 = vmatprep.mubr.f32.mxu0 0.0
      %v575 = vand.u32 %v211, 4294901760
      %576 = vmatmul.mubr.f32.gmra.mrb[0].mxu0 %v575
      %v577 = vpop.f32.mrb[0].mxu0
      %v578 = vadd.f32 %v354, %v577
      %v579 = vpop.f32.mrb[0].mxu0
      %580 = vmatprep.mubr.f32.mxu0 0.0
      %v581 = vand.u32 %v214, 4294901760
      %582 = vmatmul.mubr.f32.gmra.mrb[0].mxu0 %v581
      %v583 = vpop.f32.mrb[0].mxu0
      %v584 = vadd.f32 %v364, %v583
      %v585 = vpop.f32.mrb[0].mxu0
      %586 = vmatprep.mubr.f32.mxu0 0.0
      %v587 = vand.u32 %v217, 4294901760
      %588 = vmatmul.mubr.f32.gmra.mrb[0].mxu0 %v587
      %v589 = vpop.f32.mrb[0].mxu0
      %v590 = vadd.f32 %v374, %v589
      %v591 = vpop.f32.mrb[0].mxu0
      %592 = vmatprep.mubr.f32.mxu0 0.0
      %v593 = vand.u32 %v220, 4294901760
      %594 = vmatmul.mubr.f32.gmra.mrb[0].mxu0 %v593
      %v595 = vpop.f32.mrb[0].mxu0
      %v596 = vadd.f32 %v384, %v595
      %v597 = vpop.f32.mrb[0].mxu0
      %598 = vmatprep.mubr.f32.mxu0 0.0
      %v599 = vand.u32 %v223, 4294901760
      %600 = vmatmul.mubr.f32.gmra.mrb[0].mxu0 %v599
      %v601 = vpop.f32.mrb[0].mxu0
      %v602 = vadd.f32 %v394, %v601
      %v603 = vpop.f32.mrb[0].mxu0
      %604 = vmatprep.mubr.f32.mxu0 0.0
      %v605 = vand.u32 %v226, 4294901760
      %606 = vmatmul.mubr.f32.gmra.mrb[0].mxu0 %v605
      %v607 = vpop.f32.mrb[0].mxu0
      %v608 = vadd.f32 %v404, %v607
      %v609 = vpop.f32.mrb[0].mxu0
      %610 = vmatprep.mubr.f32.mxu0 0.0
      %v611 = vand.u32 %v229, 4294901760
      %612 = vmatmul.mubr.f32.gmra.mrb[0].mxu0 %v611
      %v613 = vpop.f32.mrb[0].mxu0
      %v614 = vadd.f32 %v414, %v613
      %v615 = vpop.f32.mrb[0].mxu0
      %616 = vmatprep.mubr.f32.mxu0 0.0
      %v617 = vand.u32 %v232, 4294901760
      %618 = vmatmul.mubr.f32.gmra.mrb[0].mxu0 %v617
      %v619 = vpop.f32.mrb[0].mxu0
      %v620 = vadd.f32 %v424, %v619
      %v621 = vpop.f32.mrb[0].mxu0
      %622 = vmatprep.mubr.f32.mxu0 0.0
      %v623 = vand.u32 %v235, 4294901760
      %624 = vmatmul.mubr.f32.gmra.mrb[0].mxu0 %v623
      %v625 = vpop.f32.mrb[0].mxu0
      %v626 = vadd.f32 %v434, %v625
      %v627 = vpop.f32.mrb[0].mxu0
      %628 = vmatprep.mubr.f32.mxu0 0.0
      %v629 = vand.u32 %v238, 4294901760
      %630 = vmatmul.mubr.f32.gmra.mrb[0].mxu0 %v629
      %v631 = vpop.f32.mrb[0].mxu0
      %v632 = vadd.f32 %v444, %v631
      %v633 = vpop.f32.mrb[0].mxu0
      %634 = vmatprep.mubr.f32.mxu0 0.0
      %v635 = vand.u32 %v241, 4294901760
      %636 = vmatmul.mubr.f32.gmra.mrb[0].mxu0 %v635
      %v637 = vpop.f32.mrb[0].mxu0
      %v638 = vadd.f32 %v454, %v637
      %v639 = vpop.f32.mrb[0].mxu0
      %640 = vmatprep.mubr.f32.mxu0 0.0
      %v641 = vand.u32 %v244, 4294901760
      %642 = vmatmul.mubr.f32.gmra.mrb[0].mxu0 %v641
      %v643 = vpop.f32.mrb[0].mxu0
      %v644 = vadd.f32 %v464, %v643
      %v645 = vpop.f32.mrb[0].mxu0
      %646 = vmatprep.mubr.f32.mxu0 0.0
      %v647 = vand.u32 %v247, 4294901760
      %648 = vmatmul.mubr.f32.gmra.mrb[0].mxu0 %v647
      %v649 = vpop.f32.mrb[0].mxu0
      %v650 = vadd.f32 %v474, %v649
      %v651 = vpop.f32.mrb[0].mxu0
      %652 = vdwg.mxu0
      %653 = vmatprep.subr.mxu0 0.0
      %v654 = vand.u32 %v190, 4294901760
      %v655 = vsub.f32 %v190, %v654
      %656 = vmatpush1.msra.mxu0 %v655
      %657 = vmatprep.subr.mxu0 0.0
      %v658 = vand.u32 %v191, 4294901760
      %v659 = vsub.f32 %v191, %v658
      %660 = vmatpush1.msra.mxu0 %v659
      %661 = vmatprep.subr.mxu0 0.0
      %v662 = vand.u32 %v192, 4294901760
      %v663 = vsub.f32 %v192, %v662
      %664 = vmatpush1.msra.mxu0 %v663
      %665 = vmatprep.subr.mxu0 0.0
      %666 = vmatpush1.msra.mxu0 0.0
      %667 = vmatprep.subr.mxu0 0.0
      %668 = vmatpush1.msra.mxu0 0.0
      %669 = vmatprep.subr.mxu0 0.0
      %670 = vmatpush1.msra.mxu0 0.0
      %671 = vmatprep.subr.mxu0 0.0
      %672 = vmatpush1.msra.mxu0 0.0
      %673 = vmatprep.subr.mxu0 0.0
      %674 = vmatpush1.msra.mxu0 0.0
      %675 = vmatprep.subr.mxu0 0.0
      %676 = vmatpush1.msra.mxu0 0.0
      %677 = vmatprep.subr.mxu0 0.0
      %678 = vmatpush1.msra.mxu0 0.0
      %679 = vmatprep.subr.mxu0 0.0
      %680 = vmatpush1.msra.mxu0 0.0
      %681 = vmatprep.subr.mxu0 0.0
      %682 = vmatpush1.msra.mxu0 0.0
      %683 = vmatprep.subr.mxu0 0.0
      %684 = vmatpush1.msra.mxu0 0.0
      %685 = vmatprep.subr.mxu0 0.0
      %686 = vmatpush1.msra.mxu0 0.0
      %687 = vmatprep.subr.mxu0 0.0
      %688 = vmatpush1.msra.mxu0 0.0
      %689 = vmatprep.subr.mxu0 0.0
      %690 = vmatpush1.msra.mxu0 0.0
      %691 = vmatprep.subr.mxu0 0.0
      %692 = vmatpush1.msra.mxu0 0.0
      %693 = vmatprep.subr.mxu0 0.0
      %694 = vmatpush1.msra.mxu0 0.0
      %695 = vmatprep.subr.mxu0 0.0
      %696 = vmatpush1.msra.mxu0 0.0
      %697 = vmatprep.subr.mxu0 0.0
      %698 = vmatpush1.msra.mxu0 0.0
      %699 = vmatprep.subr.mxu0 0.0
      %700 = vmatpush1.msra.mxu0 0.0
      %701 = vmatprep.subr.mxu0 0.0
      %702 = vmatpush1.msra.mxu0 0.0
      %703 = vmatprep.subr.mxu0 0.0
      %704 = vmatpush1.msra.mxu0 0.0
      %705 = vmatprep.subr.mxu0 0.0
      %706 = vmatpush1.msra.mxu0 0.0
      %707 = vmatprep.subr.mxu0 0.0
      %708 = vmatpush1.msra.mxu0 0.0
      %709 = vmatprep.subr.mxu0 0.0
      %710 = vmatpush1.msra.mxu0 0.0
      %711 = vmatprep.subr.mxu0 0.0
      %712 = vmatpush1.msra.mxu0 0.0
      %713 = vmatprep.subr.mxu0 0.0
      %714 = vmatpush1.msra.mxu0 0.0
      %715 = vmatprep.subr.mxu0 0.0
      %716 = vmatpush1.msra.mxu0 0.0
      %717 = vmatprep.subr.mxu0 0.0
      %718 = vmatpush1.msra.mxu0 0.0
      %719 = vmatprep.subr.mxu0 0.0
      %720 = vmatpush1.msra.mxu0 0.0
      %721 = vmatprep.subr.mxu0 0.0
      %722 = vmatpush1.msra.mxu0 0.0
      %723 = vmatprep.mubr.f32.mxu0 0.0
      %v724 = vand.u32 %v202, 4294901760
      %v725 = vsub.f32 %v202, %v724
      %726 = vmatmul.mubr.f32.gmra.mrb[0].mxu0 %v725
      %v727 = vpop.f32.mrb[0].mxu0
      %v728 = vadd.f32 %v560, %v727
      %v729 = vpop.f32.mrb[0].mxu0
      %730 = vmatprep.mubr.f32.mxu0 0.0
      %v731 = vand.u32 %v205, 4294901760
      %v732 = vsub.f32 %v205, %v731
      %733 = vmatmul.mubr.f32.gmra.mrb[0].mxu0 %v732
      %v734 = vpop.f32.mrb[0].mxu0
      %v735 = vadd.f32 %v566, %v734
      %v736 = vpop.f32.mrb[0].mxu0
      %737 = vmatprep.mubr.f32.mxu0 0.0
      %v738 = vand.u32 %v208, 4294901760
      %v739 = vsub.f32 %v208, %v738
      %740 = vmatmul.mubr.f32.gmra.mrb[0].mxu0 %v739
      %v741 = vpop.f32.mrb[0].mxu0
      %v742 = vadd.f32 %v572, %v741
      %v743 = vpop.f32.mrb[0].mxu0
      %744 = vmatprep.mubr.f32.mxu0 0.0
      %v745 = vand.u32 %v211, 4294901760
      %v746 = vsub.f32 %v211, %v745
      %747 = vmatmul.mubr.f32.gmra.mrb[0].mxu0 %v746
      %v748 = vpop.f32.mrb[0].mxu0
      %v749 = vadd.f32 %v578, %v748
      %v750 = vpop.f32.mrb[0].mxu0
      %751 = vmatprep.mubr.f32.mxu0 0.0
      %v752 = vand.u32 %v214, 4294901760
      %v753 = vsub.f32 %v214, %v752
      %754 = vmatmul.mubr.f32.gmra.mrb[0].mxu0 %v753
      %v755 = vpop.f32.mrb[0].mxu0
      %v756 = vadd.f32 %v584, %v755
      %v757 = vpop.f32.mrb[0].mxu0
      %758 = vmatprep.mubr.f32.mxu0 0.0
      %v759 = vand.u32 %v217, 4294901760
      %v760 = vsub.f32 %v217, %v759
      %761 = vmatmul.mubr.f32.gmra.mrb[0].mxu0 %v760
      %v762 = vpop.f32.mrb[0].mxu0
      %v763 = vadd.f32 %v590, %v762
      %v764 = vpop.f32.mrb[0].mxu0
      %765 = vmatprep.mubr.f32.mxu0 0.0
      %v766 = vand.u32 %v220, 4294901760
      %v767 = vsub.f32 %v220, %v766
      %768 = vmatmul.mubr.f32.gmra.mrb[0].mxu0 %v767
      %v769 = vpop.f32.mrb[0].mxu0
      %v770 = vadd.f32 %v596, %v769
      %v771 = vpop.f32.mrb[0].mxu0
      %772 = vmatprep.mubr.f32.mxu0 0.0
      %v773 = vand.u32 %v223, 4294901760
      %v774 = vsub.f32 %v223, %v773
      %775 = vmatmul.mubr.f32.gmra.mrb[0].mxu0 %v774
      %v776 = vpop.f32.mrb[0].mxu0
      %v777 = vadd.f32 %v602, %v776
      %v778 = vpop.f32.mrb[0].mxu0
      %779 = vmatprep.mubr.f32.mxu0 0.0
      %v780 = vand.u32 %v226, 4294901760
      %v781 = vsub.f32 %v226, %v780
      %782 = vmatmul.mubr.f32.gmra.mrb[0].mxu0 %v781
      %v783 = vpop.f32.mrb[0].mxu0
      %v784 = vadd.f32 %v608, %v783
      %v785 = vpop.f32.mrb[0].mxu0
      %786 = vmatprep.mubr.f32.mxu0 0.0
      %v787 = vand.u32 %v229, 4294901760
      %v788 = vsub.f32 %v229, %v787
      %789 = vmatmul.mubr.f32.gmra.mrb[0].mxu0 %v788
      %v790 = vpop.f32.mrb[0].mxu0
      %v791 = vadd.f32 %v614, %v790
      %v792 = vpop.f32.mrb[0].mxu0
      %793 = vmatprep.mubr.f32.mxu0 0.0
      %v794 = vand.u32 %v232, 4294901760
      %v795 = vsub.f32 %v232, %v794
      %796 = vmatmul.mubr.f32.gmra.mrb[0].mxu0 %v795
      %v797 = vpop.f32.mrb[0].mxu0
      %v798 = vadd.f32 %v620, %v797
      %v799 = vpop.f32.mrb[0].mxu0
      %800 = vmatprep.mubr.f32.mxu0 0.0
      %v801 = vand.u32 %v235, 4294901760
      %v802 = vsub.f32 %v235, %v801
      %803 = vmatmul.mubr.f32.gmra.mrb[0].mxu0 %v802
      %v804 = vpop.f32.mrb[0].mxu0
      %v805 = vadd.f32 %v626, %v804
      %v806 = vpop.f32.mrb[0].mxu0
      %807 = vmatprep.mubr.f32.mxu0 0.0
      %v808 = vand.u32 %v238, 4294901760
      %v809 = vsub.f32 %v238, %v808
      %810 = vmatmul.mubr.f32.gmra.mrb[0].mxu0 %v809
      %v811 = vpop.f32.mrb[0].mxu0
      %v812 = vadd.f32 %v632, %v811
      %v813 = vpop.f32.mrb[0].mxu0
      %814 = vmatprep.mubr.f32.mxu0 0.0
      %v815 = vand.u32 %v241, 4294901760
      %v816 = vsub.f32 %v241, %v815
      %817 = vmatmul.mubr.f32.gmra.mrb[0].mxu0 %v816
      %v818 = vpop.f32.mrb[0].mxu0
      %v819 = vadd.f32 %v638, %v818
      %v820 = vpop.f32.mrb[0].mxu0
      %821 = vmatprep.mubr.f32.mxu0 0.0
      %v822 = vand.u32 %v244, 4294901760
      %v823 = vsub.f32 %v244, %v822
      %824 = vmatmul.mubr.f32.gmra.mrb[0].mxu0 %v823
      %v825 = vpop.f32.mrb[0].mxu0
      %v826 = vadd.f32 %v644, %v825
      %v827 = vpop.f32.mrb[0].mxu0
      %828 = vmatprep.mubr.f32.mxu0 0.0
      %v829 = vand.u32 %v247, 4294901760
      %v830 = vsub.f32 %v247, %v829
      %831 = vmatmul.mubr.f32.gmra.mrb[0].mxu0 %v830
      %v832 = vpop.f32.mrb[0].mxu0
      %v833 = vadd.f32 %v650, %v832
      %v834 = vpop.f32.mrb[0].mxu0
      %835 = vdwg.mxu0
      %836 = vmatprep.subr.mxu0 0.0
      %v837 = vand.u32 %v190, 4294901760
      %838 = vmatpush1.msra.mxu0 %v837
      %839 = vmatprep.subr.mxu0 0.0
      %v840 = vand.u32 %v191, 4294901760
      %841 = vmatpush1.msra.mxu0 %v840
      %842 = vmatprep.subr.mxu0 0.0
      %v843 = vand.u32 %v192, 4294901760
      %844 = vmatpush1.msra.mxu0 %v843
      %845 = vmatprep.subr.mxu0 0.0
      %846 = vmatpush1.msra.mxu0 0.0
      %847 = vmatprep.subr.mxu0 0.0
      %848 = vmatpush1.msra.mxu0 0.0
      %849 = vmatprep.subr.mxu0 0.0
      %850 = vmatpush1.msra.mxu0 0.0
      %851 = vmatprep.subr.mxu0 0.0
      %852 = vmatpush1.msra.mxu0 0.0
      %853 = vmatprep.subr.mxu0 0.0
      %854 = vmatpush1.msra.mxu0 0.0
      %855 = vmatprep.subr.mxu0 0.0
      %856 = vmatpush1.msra.mxu0 0.0
      %857 = vmatprep.subr.mxu0 0.0
      %858 = vmatpush1.msra.mxu0 0.0
      %859 = vmatprep.subr.mxu0 0.0
      %860 = vmatpush1.msra.mxu0 0.0
      %861 = vmatprep.subr.mxu0 0.0
      %862 = vmatpush1.msra.mxu0 0.0
      %863 = vmatprep.subr.mxu0 0.0
      %864 = vmatpush1.msra.mxu0 0.0
      %865 = vmatprep.subr.mxu0 0.0
      %866 = vmatpush1.msra.mxu0 0.0
      %867 = vmatprep.subr.mxu0 0.0
      %868 = vmatpush1.msra.mxu0 0.0
      %869 = vmatprep.subr.mxu0 0.0
      %870 = vmatpush1.msra.mxu0 0.0
      %871 = vmatprep.subr.mxu0 0.0
      %872 = vmatpush1.msra.mxu0 0.0
      %873 = vmatprep.subr.mxu0 0.0
      %874 = vmatpush1.msra.mxu0 0.0
      %875 = vmatprep.subr.mxu0 0.0
      %876 = vmatpush1.msra.mxu0 0.0
      %877 = vmatprep.subr.mxu0 0.0
      %878 = vmatpush1.msra.mxu0 0.0
      %879 = vmatprep.subr.mxu0 0.0
      %880 = vmatpush1.msra.mxu0 0.0
      %881 = vmatprep.subr.mxu0 0.0
      %882 = vmatpush1.msra.mxu0 0.0
      %883 = vmatprep.subr.mxu0 0.0
      %884 = vmatpush1.msra.mxu0 0.0
      %885 = vmatprep.subr.mxu0 0.0
      %886 = vmatpush1.msra.mxu0 0.0
      %887 = vmatprep.subr.mxu0 0.0
      %888 = vmatpush1.msra.mxu0 0.0
      %889 = vmatprep.subr.mxu0 0.0
      %890 = vmatpush1.msra.mxu0 0.0
      %891 = vmatprep.subr.mxu0 0.0
      %892 = vmatpush1.msra.mxu0 0.0
      %893 = vmatprep.subr.mxu0 0.0
      %894 = vmatpush1.msra.mxu0 0.0
      %895 = vmatprep.subr.mxu0 0.0
      %896 = vmatpush1.msra.mxu0 0.0
      %897 = vmatprep.subr.mxu0 0.0
      %898 = vmatpush1.msra.mxu0 0.0
      %899 = vmatprep.subr.mxu0 0.0
      %900 = vmatpush1.msra.mxu0 0.0
      %901 = vmatprep.subr.mxu0 0.0
      %902 = vmatpush1.msra.mxu0 0.0
      %903 = vmatprep.mubr.f32.mxu0 0.0
      %v904 = vand.u32 %v202, 4294901760
      %v905 = vsub.f32 %v202, %v904
      %v906 = vand.u32 %v905, 4294901760
      %907 = vmatmul.mubr.f32.gmra.mrb[0].mxu0 %v906
      %v908 = vpop.f32.mrb[0].mxu0
      %v909 = vadd.f32 %v728, %v908
      %v910 = vpop.f32.mrb[0].mxu0
      %911 = vmatprep.mubr.f32.mxu0 0.0
      %v912 = vand.u32 %v205, 4294901760
      %v913 = vsub.f32 %v205, %v912
      %v914 = vand.u32 %v913, 4294901760
      %915 = vmatmul.mubr.f32.gmra.mrb[0].mxu0 %v914
      %v916 = vpop.f32.mrb[0].mxu0
      %v917 = vadd.f32 %v735, %v916
      %v918 = vpop.f32.mrb[0].mxu0
      %919 = vmatprep.mubr.f32.mxu0 0.0
      %v920 = vand.u32 %v208, 4294901760
      %v921 = vsub.f32 %v208, %v920
      %v922 = vand.u32 %v921, 4294901760
      %923 = vmatmul.mubr.f32.gmra.mrb[0].mxu0 %v922
      %v924 = vpop.f32.mrb[0].mxu0
      %v925 = vadd.f32 %v742, %v924
      %v926 = vpop.f32.mrb[0].mxu0
      %927 = vmatprep.mubr.f32.mxu0 0.0
      %v928 = vand.u32 %v211, 4294901760
      %v929 = vsub.f32 %v211, %v928
      %v930 = vand.u32 %v929, 4294901760
      %931 = vmatmul.mubr.f32.gmra.mrb[0].mxu0 %v930
      %v932 = vpop.f32.mrb[0].mxu0
      %v933 = vadd.f32 %v749, %v932
      %v934 = vpop.f32.mrb[0].mxu0
      %935 = vmatprep.mubr.f32.mxu0 0.0
      %v936 = vand.u32 %v214, 4294901760
      %v937 = vsub.f32 %v214, %v936
      %v938 = vand.u32 %v937, 4294901760
      %939 = vmatmul.mubr.f32.gmra.mrb[0].mxu0 %v938
      %v940 = vpop.f32.mrb[0].mxu0
      %v941 = vadd.f32 %v756, %v940
      %v942 = vpop.f32.mrb[0].mxu0
      %943 = vmatprep.mubr.f32.mxu0 0.0
      %v944 = vand.u32 %v217, 4294901760
      %v945 = vsub.f32 %v217, %v944
      %v946 = vand.u32 %v945, 4294901760
      %947 = vmatmul.mubr.f32.gmra.mrb[0].mxu0 %v946
      %v948 = vpop.f32.mrb[0].mxu0
      %v949 = vadd.f32 %v763, %v948
      %v950 = vpop.f32.mrb[0].mxu0
      %951 = vmatprep.mubr.f32.mxu0 0.0
      %v952 = vand.u32 %v220, 4294901760
      %v953 = vsub.f32 %v220, %v952
      %v954 = vand.u32 %v953, 4294901760
      %955 = vmatmul.mubr.f32.gmra.mrb[0].mxu0 %v954
      %v956 = vpop.f32.mrb[0].mxu0
      %v957 = vadd.f32 %v770, %v956
      %v958 = vpop.f32.mrb[0].mxu0
      %959 = vmatprep.mubr.f32.mxu0 0.0
      %v960 = vand.u32 %v223, 4294901760
      %v961 = vsub.f32 %v223, %v960
      %v962 = vand.u32 %v961, 4294901760
      %963 = vmatmul.mubr.f32.gmra.mrb[0].mxu0 %v962
      %v964 = vpop.f32.mrb[0].mxu0
      %v965 = vadd.f32 %v777, %v964
      %v966 = vpop.f32.mrb[0].mxu0
      %967 = vmatprep.mubr.f32.mxu0 0.0
      %v968 = vand.u32 %v226, 4294901760
      %v969 = vsub.f32 %v226, %v968
      %v970 = vand.u32 %v969, 4294901760
      %971 = vmatmul.mubr.f32.gmra.mrb[0].mxu0 %v970
      %v972 = vpop.f32.mrb[0].mxu0
      %v973 = vadd.f32 %v784, %v972
      %v974 = vpop.f32.mrb[0].mxu0
      %975 = vmatprep.mubr.f32.mxu0 0.0
      %v976 = vand.u32 %v229, 4294901760
      %v977 = vsub.f32 %v229, %v976
      %v978 = vand.u32 %v977, 4294901760
      %979 = vmatmul.mubr.f32.gmra.mrb[0].mxu0 %v978
      %v980 = vpop.f32.mrb[0].mxu0
      %v981 = vadd.f32 %v791, %v980
      %v982 = vpop.f32.mrb[0].mxu0
      %983 = vmatprep.mubr.f32.mxu0 0.0
      %v984 = vand.u32 %v232, 4294901760
      %v985 = vsub.f32 %v232, %v984
      %v986 = vand.u32 %v985, 4294901760
      %987 = vmatmul.mubr.f32.gmra.mrb[0].mxu0 %v986
      %v988 = vpop.f32.mrb[0].mxu0
      %v989 = vadd.f32 %v798, %v988
      %v990 = vpop.f32.mrb[0].mxu0
      %991 = vmatprep.mubr.f32.mxu0 0.0
      %v992 = vand.u32 %v235, 4294901760
      %v993 = vsub.f32 %v235, %v992
      %v994 = vand.u32 %v993, 4294901760
      %995 = vmatmul.mubr.f32.gmra.mrb[0].mxu0 %v994
      %v996 = vpop.f32.mrb[0].mxu0
      %v997 = vadd.f32 %v805, %v996
      %v998 = vpop.f32.mrb[0].mxu0
      %999 = vmatprep.mubr.f32.mxu0 0.0
      %v1000 = vand.u32 %v238, 4294901760
      %v1001 = vsub.f32 %v238, %v1000
      %v1002 = vand.u32 %v1001, 4294901760
      %1003 = vmatmul.mubr.f32.gmra.mrb[0].mxu0 %v1002
      %v1004 = vpop.f32.mrb[0].mxu0
      %v1005 = vadd.f32 %v812, %v1004
      %v1006 = vpop.f32.mrb[0].mxu0
      %1007 = vmatprep.mubr.f32.mxu0 0.0
      %v1008 = vand.u32 %v241, 4294901760
      %v1009 = vsub.f32 %v241, %v1008
      %v1010 = vand.u32 %v1009, 4294901760
      %1011 = vmatmul.mubr.f32.gmra.mrb[0].mxu0 %v1010
      %v1012 = vpop.f32.mrb[0].mxu0
      %v1013 = vadd.f32 %v819, %v1012
      %v1014 = vpop.f32.mrb[0].mxu0
      %1015 = vmatprep.mubr.f32.mxu0 0.0
      %v1016 = vand.u32 %v244, 4294901760
      %v1017 = vsub.f32 %v244, %v1016
      %v1018 = vand.u32 %v1017, 4294901760
      %1019 = vmatmul.mubr.f32.gmra.mrb[0].mxu0 %v1018
      %v1020 = vpop.f32.mrb[0].mxu0
      %v1021 = vadd.f32 %v826, %v1020
      %v1022 = vpop.f32.mrb[0].mxu0
      %1023 = vmatprep.mubr.f32.mxu0 0.0
      %v1024 = vand.u32 %v247, 4294901760
      %v1025 = vsub.f32 %v247, %v1024
      %v1026 = vand.u32 %v1025, 4294901760
      %1027 = vmatmul.mubr.f32.gmra.mrb[0].mxu0 %v1026
      %v1028 = vpop.f32.mrb[0].mxu0
      %v1029 = vadd.f32 %v833, %v1028
      %v1030 = vpop.f32.mrb[0].mxu0
      %1031 = vdwg.mxu0
      %1032 = vmatprep.subr.mxu0 0.0
      %v1033 = vand.u32 %v190, 4294901760
      %v1034 = vsub.f32 %v190, %v1033
      %v1035 = vand.u32 %v1034, 4294901760
      %1036 = vmatpush1.msra.mxu0 %v1035
      %1037 = vmatprep.subr.mxu0 0.0
      %v1038 = vand.u32 %v191, 4294901760
      %v1039 = vsub.f32 %v191, %v1038
      %v1040 = vand.u32 %v1039, 4294901760
      %1041 = vmatpush1.msra.mxu0 %v1040
      %1042 = vmatprep.subr.mxu0 0.0
      %v1043 = vand.u32 %v192, 4294901760
      %v1044 = vsub.f32 %v192, %v1043
      %v1045 = vand.u32 %v1044, 4294901760
      %1046 = vmatpush1.msra.mxu0 %v1045
      %1047 = vmatprep.subr.mxu0 0.0
      %1048 = vmatpush1.msra.mxu0 0.0
      %1049 = vmatprep.subr.mxu0 0.0
      %1050 = vmatpush1.msra.mxu0 0.0
      %1051 = vmatprep.subr.mxu0 0.0
      %1052 = vmatpush1.msra.mxu0 0.0
      %1053 = vmatprep.subr.mxu0 0.0
      %1054 = vmatpush1.msra.mxu0 0.0
      %1055 = vmatprep.subr.mxu0 0.0
      %1056 = vmatpush1.msra.mxu0 0.0
      %1057 = vmatprep.subr.mxu0 0.0
      %1058 = vmatpush1.msra.mxu0 0.0
      %1059 = vmatprep.subr.mxu0 0.0
      %1060 = vmatpush1.msra.mxu0 0.0
      %1061 = vmatprep.subr.mxu0 0.0
      %1062 = vmatpush1.msra.mxu0 0.0
      %1063 = vmatprep.subr.mxu0 0.0
      %1064 = vmatpush1.msra.mxu0 0.0
      %1065 = vmatprep.subr.mxu0 0.0
      %1066 = vmatpush1.msra.mxu0 0.0
      %1067 = vmatprep.subr.mxu0 0.0
      %1068 = vmatpush1.msra.mxu0 0.0
      %1069 = vmatprep.subr.mxu0 0.0
      %1070 = vmatpush1.msra.mxu0 0.0
      %1071 = vmatprep.subr.mxu0 0.0
      %1072 = vmatpush1.msra.mxu0 0.0
      %1073 = vmatprep.subr.mxu0 0.0
      %1074 = vmatpush1.msra.mxu0 0.0
      %1075 = vmatprep.subr.mxu0 0.0
      %1076 = vmatpush1.msra.mxu0 0.0
      %1077 = vmatprep.subr.mxu0 0.0
      %1078 = vmatpush1.msra.mxu0 0.0
      %1079 = vmatprep.subr.mxu0 0.0
      %1080 = vmatpush1.msra.mxu0 0.0
      %1081 = vmatprep.subr.mxu0 0.0
      %1082 = vmatpush1.msra.mxu0 0.0
      %1083 = vmatprep.subr.mxu0 0.0
      %1084 = vmatpush1.msra.mxu0 0.0
      %1085 = vmatprep.subr.mxu0 0.0
      %1086 = vmatpush1.msra.mxu0 0.0
      %1087 = vmatprep.subr.mxu0 0.0
      %1088 = vmatpush1.msra.mxu0 0.0
      %1089 = vmatprep.subr.mxu0 0.0
      %1090 = vmatpush1.msra.mxu0 0.0
      %1091 = vmatprep.subr.mxu0 0.0
      %1092 = vmatpush1.msra.mxu0 0.0
      %1093 = vmatprep.subr.mxu0 0.0
      %1094 = vmatpush1.msra.mxu0 0.0
      %1095 = vmatprep.subr.mxu0 0.0
      %1096 = vmatpush1.msra.mxu0 0.0
      %1097 = vmatprep.subr.mxu0 0.0
      %1098 = vmatpush1.msra.mxu0 0.0
      %1099 = vmatprep.subr.mxu0 0.0
      %1100 = vmatpush1.msra.mxu0 0.0
      %1101 = vmatprep.subr.mxu0 0.0
      %1102 = vmatpush1.msra.mxu0 0.0
      %1103 = vmatprep.subr.mxu0 0.0
      %1104 = vmatpush1.msra.mxu0 0.0
      %1105 = vmatprep.mubr.f32.mxu0 0.0
      %v1106 = vand.u32 %v202, 4294901760
      %1107 = vmatmul.mubr.f32.gmra.mrb[0].mxu0 %v1106
      %v1108 = vpop.f32.mrb[0].mxu0
      %v1109 = vadd.f32 %v909, %v1108
      %v1110 = vpop.f32.mrb[0].mxu0
      %1111 = vmatprep.mubr.f32.mxu0 0.0
      %v1112 = vand.u32 %v205, 4294901760
      %1113 = vmatmul.mubr.f32.gmra.mrb[0].mxu0 %v1112
      %v1114 = vpop.f32.mrb[0].mxu0
      %v1115 = vadd.f32 %v917, %v1114
      %v1116 = vpop.f32.mrb[0].mxu0
      %1117 = vmatprep.mubr.f32.mxu0 0.0
      %v1118 = vand.u32 %v208, 4294901760
      %1119 = vmatmul.mubr.f32.gmra.mrb[0].mxu0 %v1118
      %v1120 = vpop.f32.mrb[0].mxu0
      %v1121 = vadd.f32 %v925, %v1120
      %v1122 = vpop.f32.mrb[0].mxu0
      %1123 = vmatprep.mubr.f32.mxu0 0.0
      %v1124 = vand.u32 %v211, 4294901760
      %1125 = vmatmul.mubr.f32.gmra.mrb[0].mxu0 %v1124
      %v1126 = vpop.f32.mrb[0].mxu0
      %v1127 = vadd.f32 %v933, %v1126
      %v1128 = vpop.f32.mrb[0].mxu0
      %1129 = vmatprep.mubr.f32.mxu0 0.0
      %v1130 = vand.u32 %v214, 4294901760
      %1131 = vmatmul.mubr.f32.gmra.mrb[0].mxu0 %v1130
      %v1132 = vpop.f32.mrb[0].mxu0
      %v1133 = vadd.f32 %v941, %v1132
      %v1134 = vpop.f32.mrb[0].mxu0
      %1135 = vmatprep.mubr.f32.mxu0 0.0
      %v1136 = vand.u32 %v217, 4294901760
      %1137 = vmatmul.mubr.f32.gmra.mrb[0].mxu0 %v1136
      %v1138 = vpop.f32.mrb[0].mxu0
      %v1139 = vadd.f32 %v949, %v1138
      %v1140 = vpop.f32.mrb[0].mxu0
      %1141 = vmatprep.mubr.f32.mxu0 0.0
      %v1142 = vand.u32 %v220, 4294901760
      %1143 = vmatmul.mubr.f32.gmra.mrb[0].mxu0 %v1142
      %v1144 = vpop.f32.mrb[0].mxu0
      %v1145 = vadd.f32 %v957, %v1144
      %v1146 = vpop.f32.mrb[0].mxu0
      %1147 = vmatprep.mubr.f32.mxu0 0.0
      %v1148 = vand.u32 %v223, 4294901760
      %1149 = vmatmul.mubr.f32.gmra.mrb[0].mxu0 %v1148
      %v1150 = vpop.f32.mrb[0].mxu0
      %v1151 = vadd.f32 %v965, %v1150
      %v1152 = vpop.f32.mrb[0].mxu0
      %1153 = vmatprep.mubr.f32.mxu0 0.0
      %v1154 = vand.u32 %v226, 4294901760
      %1155 = vmatmul.mubr.f32.gmra.mrb[0].mxu0 %v1154
      %v1156 = vpop.f32.mrb[0].mxu0
      %v1157 = vadd.f32 %v973, %v1156
      %v1158 = vpop.f32.mrb[0].mxu0
      %1159 = vmatprep.mubr.f32.mxu0 0.0
      %v1160 = vand.u32 %v229, 4294901760
      %1161 = vmatmul.mubr.f32.gmra.mrb[0].mxu0 %v1160
      %v1162 = vpop.f32.mrb[0].mxu0
      %v1163 = vadd.f32 %v981, %v1162
      %v1164 = vpop.f32.mrb[0].mxu0
      %1165 = vmatprep.mubr.f32.mxu0 0.0
      %v1166 = vand.u32 %v232, 4294901760
      %1167 = vmatmul.mubr.f32.gmra.mrb[0].mxu0 %v1166
      %v1168 = vpop.f32.mrb[0].mxu0
      %v1169 = vadd.f32 %v989, %v1168
      %v1170 = vpop.f32.mrb[0].mxu0
      %1171 = vmatprep.mubr.f32.mxu0 0.0
      %v1172 = vand.u32 %v235, 4294901760
      %1173 = vmatmul.mubr.f32.gmra.mrb[0].mxu0 %v1172
      %v1174 = vpop.f32.mrb[0].mxu0
      %v1175 = vadd.f32 %v997, %v1174
      %v1176 = vpop.f32.mrb[0].mxu0
      %1177 = vmatprep.mubr.f32.mxu0 0.0
      %v1178 = vand.u32 %v238, 4294901760
      %1179 = vmatmul.mubr.f32.gmra.mrb[0].mxu0 %v1178
      %v1180 = vpop.f32.mrb[0].mxu0
      %v1181 = vadd.f32 %v1005, %v1180
      %v1182 = vpop.f32.mrb[0].mxu0
      %1183 = vmatprep.mubr.f32.mxu0 0.0
      %v1184 = vand.u32 %v241, 4294901760
      %1185 = vmatmul.mubr.f32.gmra.mrb[0].mxu0 %v1184
      %v1186 = vpop.f32.mrb[0].mxu0
      %v1187 = vadd.f32 %v1013, %v1186
      %v1188 = vpop.f32.mrb[0].mxu0
      %1189 = vmatprep.mubr.f32.mxu0 0.0
      %v1190 = vand.u32 %v244, 4294901760
      %1191 = vmatmul.mubr.f32.gmra.mrb[0].mxu0 %v1190
      %v1192 = vpop.f32.mrb[0].mxu0
      %v1193 = vadd.f32 %v1021, %v1192
      %v1194 = vpop.f32.mrb[0].mxu0
      %1195 = vmatprep.mubr.f32.mxu0 0.0
      %v1196 = vand.u32 %v247, 4294901760
      %1197 = vmatmul.mubr.f32.gmra.mrb[0].mxu0 %v1196
      %v1198 = vpop.f32.mrb[0].mxu0
      %v1199 = vadd.f32 %v1029, %v1198
      %v1200 = vpop.f32.mrb[0].mxu0
      %1201 = vdwg.mxu0
      %1202 = vmatprep.subr.mxu0 0.0
      %v1203 = vand.u32 %v190, 4294901760
      %1204 = vmatpush1.msra.mxu0 %v1203
      %1205 = vmatprep.subr.mxu0 0.0
      %v1206 = vand.u32 %v191, 4294901760
      %1207 = vmatpush1.msra.mxu0 %v1206
      %1208 = vmatprep.subr.mxu0 0.0
      %v1209 = vand.u32 %v192, 4294901760
      %1210 = vmatpush1.msra.mxu0 %v1209
      %1211 = vmatprep.subr.mxu0 0.0
      %1212 = vmatpush1.msra.mxu0 0.0
      %1213 = vmatprep.subr.mxu0 0.0
      %1214 = vmatpush1.msra.mxu0 0.0
      %1215 = vmatprep.subr.mxu0 0.0
      %1216 = vmatpush1.msra.mxu0 0.0
      %1217 = vmatprep.subr.mxu0 0.0
      %1218 = vmatpush1.msra.mxu0 0.0
      %1219 = vmatprep.subr.mxu0 0.0
      %1220 = vmatpush1.msra.mxu0 0.0
      %1221 = vmatprep.subr.mxu0 0.0
      %1222 = vmatpush1.msra.mxu0 0.0
      %1223 = vmatprep.subr.mxu0 0.0
      %1224 = vmatpush1.msra.mxu0 0.0
      %1225 = vmatprep.subr.mxu0 0.0
      %1226 = vmatpush1.msra.mxu0 0.0
      %1227 = vmatprep.subr.mxu0 0.0
      %1228 = vmatpush1.msra.mxu0 0.0
      %1229 = vmatprep.subr.mxu0 0.0
      %1230 = vmatpush1.msra.mxu0 0.0
      %1231 = vmatprep.subr.mxu0 0.0
      %1232 = vmatpush1.msra.mxu0 0.0
      %1233 = vmatprep.subr.mxu0 0.0
      %1234 = vmatpush1.msra.mxu0 0.0
      %1235 = vmatprep.subr.mxu0 0.0
      %1236 = vmatpush1.msra.mxu0 0.0
      %1237 = vmatprep.subr.mxu0 0.0
      %1238 = vmatpush1.msra.mxu0 0.0
      %1239 = vmatprep.subr.mxu0 0.0
      %1240 = vmatpush1.msra.mxu0 0.0
      %1241 = vmatprep.subr.mxu0 0.0
      %1242 = vmatpush1.msra.mxu0 0.0
      %1243 = vmatprep.subr.mxu0 0.0
      %1244 = vmatpush1.msra.mxu0 0.0
      %1245 = vmatprep.subr.mxu0 0.0
      %1246 = vmatpush1.msra.mxu0 0.0
      %1247 = vmatprep.subr.mxu0 0.0
      %1248 = vmatpush1.msra.mxu0 0.0
      %1249 = vmatprep.subr.mxu0 0.0
      %1250 = vmatpush1.msra.mxu0 0.0
      %1251 = vmatprep.subr.mxu0 0.0
      %1252 = vmatpush1.msra.mxu0 0.0
      %1253 = vmatprep.subr.mxu0 0.0
      %1254 = vmatpush1.msra.mxu0 0.0
      %1255 = vmatprep.subr.mxu0 0.0
      %1256 = vmatpush1.msra.mxu0 0.0
      %1257 = vmatprep.subr.mxu0 0.0
      %1258 = vmatpush1.msra.mxu0 0.0
      %1259 = vmatprep.subr.mxu0 0.0
      %1260 = vmatpush1.msra.mxu0 0.0
      %1261 = vmatprep.subr.mxu0 0.0
      %1262 = vmatpush1.msra.mxu0 0.0
      %1263 = vmatprep.subr.mxu0 0.0
      %1264 = vmatpush1.msra.mxu0 0.0
      %1265 = vmatprep.subr.mxu0 0.0
      %1266 = vmatpush1.msra.mxu0 0.0
      %1267 = vmatprep.subr.mxu0 0.0
      %1268 = vmatpush1.msra.mxu0 0.0
      %1269 = vmatprep.mubr.f32.mxu0 0.0
      %v1270 = vand.u32 %v202, 4294901760
      %1271 = vmatmul.mubr.f32.gmra.mrb[0].mxu0 %v1270
      %v1272 = vpop.f32.mrb[0].mxu0
      %v1273 = vadd.f32 %v1109, %v1272
      %v1274 = vpop.f32.mrb[0].mxu0
      %1275 = vmatprep.mubr.f32.mxu0 0.0
      %v1276 = vand.u32 %v205, 4294901760
      %1277 = vmatmul.mubr.f32.gmra.mrb[0].mxu0 %v1276
      %v1278 = vpop.f32.mrb[0].mxu0
      %v1279 = vadd.f32 %v1115, %v1278
      %v1280 = vpop.f32.mrb[0].mxu0
      %1281 = vmatprep.mubr.f32.mxu0 0.0
      %v1282 = vand.u32 %v208, 4294901760
      %1283 = vmatmul.mubr.f32.gmra.mrb[0].mxu0 %v1282
      %v1284 = vpop.f32.mrb[0].mxu0
      %v1285 = vadd.f32 %v1121, %v1284
      %v1286 = vpop.f32.mrb[0].mxu0
      %1287 = vmatprep.mubr.f32.mxu0 0.0
      %v1288 = vand.u32 %v211, 4294901760
      %1289 = vmatmul.mubr.f32.gmra.mrb[0].mxu0 %v1288
      %v1290 = vpop.f32.mrb[0].mxu0
      %v1291 = vadd.f32 %v1127, %v1290
      %v1292 = vpop.f32.mrb[0].mxu0
      %1293 = vmatprep.mubr.f32.mxu0 0.0
      %v1294 = vand.u32 %v214, 4294901760
      %1295 = vmatmul.mubr.f32.gmra.mrb[0].mxu0 %v1294
      %v1296 = vpop.f32.mrb[0].mxu0
      %v1297 = vadd.f32 %v1133, %v1296
      %v1298 = vpop.f32.mrb[0].mxu0
      %1299 = vmatprep.mubr.f32.mxu0 0.0
      %v1300 = vand.u32 %v217, 4294901760
      %1301 = vmatmul.mubr.f32.gmra.mrb[0].mxu0 %v1300
      %v1302 = vpop.f32.mrb[0].mxu0
      %v1303 = vadd.f32 %v1139, %v1302
      %v1304 = vpop.f32.mrb[0].mxu0
      %1305 = vmatprep.mubr.f32.mxu0 0.0
      %v1306 = vand.u32 %v220, 4294901760
      %1307 = vmatmul.mubr.f32.gmra.mrb[0].mxu0 %v1306
      %v1308 = vpop.f32.mrb[0].mxu0
      %v1309 = vadd.f32 %v1145, %v1308
      %v1310 = vpop.f32.mrb[0].mxu0
      %1311 = vmatprep.mubr.f32.mxu0 0.0
      %v1312 = vand.u32 %v223, 4294901760
      %1313 = vmatmul.mubr.f32.gmra.mrb[0].mxu0 %v1312
      %v1314 = vpop.f32.mrb[0].mxu0
      %v1315 = vadd.f32 %v1151, %v1314
      %v1316 = vpop.f32.mrb[0].mxu0
      %1317 = vmatprep.mubr.f32.mxu0 0.0
      %v1318 = vand.u32 %v226, 4294901760
      %1319 = vmatmul.mubr.f32.gmra.mrb[0].mxu0 %v1318
      %v1320 = vpop.f32.mrb[0].mxu0
      %v1321 = vadd.f32 %v1157, %v1320
      %v1322 = vpop.f32.mrb[0].mxu0
      %1323 = vmatprep.mubr.f32.mxu0 0.0
      %v1324 = vand.u32 %v229, 4294901760
      %1325 = vmatmul.mubr.f32.gmra.mrb[0].mxu0 %v1324
      %v1326 = vpop.f32.mrb[0].mxu0
      %v1327 = vadd.f32 %v1163, %v1326
      %v1328 = vpop.f32.mrb[0].mxu0
      %1329 = vmatprep.mubr.f32.mxu0 0.0
      %v1330 = vand.u32 %v232, 4294901760
      %1331 = vmatmul.mubr.f32.gmra.mrb[0].mxu0 %v1330
      %v1332 = vpop.f32.mrb[0].mxu0
      %v1333 = vadd.f32 %v1169, %v1332
      %v1334 = vpop.f32.mrb[0].mxu0
      %1335 = vmatprep.mubr.f32.mxu0 0.0
      %v1336 = vand.u32 %v235, 4294901760
      %1337 = vmatmul.mubr.f32.gmra.mrb[0].mxu0 %v1336
      %v1338 = vpop.f32.mrb[0].mxu0
      %v1339 = vadd.f32 %v1175, %v1338
      %v1340 = vpop.f32.mrb[0].mxu0
      %1341 = vmatprep.mubr.f32.mxu0 0.0
      %v1342 = vand.u32 %v238, 4294901760
      %1343 = vmatmul.mubr.f32.gmra.mrb[0].mxu0 %v1342
      %v1344 = vpop.f32.mrb[0].mxu0
      %v1345 = vadd.f32 %v1181, %v1344
      %v1346 = vpop.f32.mrb[0].mxu0
      %1347 = vmatprep.mubr.f32.mxu0 0.0
      %v1348 = vand.u32 %v241, 4294901760
      %1349 = vmatmul.mubr.f32.gmra.mrb[0].mxu0 %v1348
      %v1350 = vpop.f32.mrb[0].mxu0
      %v1351 = vadd.f32 %v1187, %v1350
      %v1352 = vpop.f32.mrb[0].mxu0
      %1353 = vmatprep.mubr.f32.mxu0 0.0
      %v1354 = vand.u32 %v244, 4294901760
      %1355 = vmatmul.mubr.f32.gmra.mrb[0].mxu0 %v1354
      %v1356 = vpop.f32.mrb[0].mxu0
      %v1357 = vadd.f32 %v1193, %v1356
      %v1358 = vpop.f32.mrb[0].mxu0
      %1359 = vmatprep.mubr.f32.mxu0 0.0
      %v1360 = vand.u32 %v247, 4294901760
      %1361 = vmatmul.mubr.f32.gmra.mrb[0].mxu0 %v1360
      %v1362 = vpop.f32.mrb[0].mxu0
      %v1363 = vadd.f32 %v1199, %v1362
      %v1364 = vpop.f32.mrb[0].mxu0
      %1365 = vdwg.mxu0
      %vm1366 = vcmask 80896
      %1367 = vst.msk [vmem:[%s172] sm:$0xff] %vm1366, %v1273
      %1368 = vst.msk [vmem:[%s172 + $0x8] sm:$0xff] %vm1366, %v1279
      %1369 = vst.msk [vmem:[%s172 + $0x10] sm:$0xff] %vm1366, %v1285
      %1370 = vst.msk [vmem:[%s172 + $0x18] sm:$0xff] %vm1366, %v1291
      %1371 = vst.msk [vmem:[%s172 + $0x20] sm:$0xff] %vm1366, %v1297
      %1372 = vst.msk [vmem:[%s172 + $0x28] sm:$0xff] %vm1366, %v1303
      %1373 = vst.msk [vmem:[%s172 + $0x30] sm:$0xff] %vm1366, %v1309
      %1374 = vst.msk [vmem:[%s172 + $0x38] sm:$0xff] %vm1366, %v1315
      %1375 = vst.msk [vmem:[%s172 + $0x40] sm:$0xff] %vm1366, %v1321
      %1376 = vst.msk [vmem:[%s172 + $0x48] sm:$0xff] %vm1366, %v1327
      %1377 = vst.msk [vmem:[%s172 + $0x50] sm:$0xff] %vm1366, %v1333
      %1378 = vst.msk [vmem:[%s172 + $0x58] sm:$0xff] %vm1366, %v1339
      %1379 = vst.msk [vmem:[%s172 + $0x60] sm:$0xff] %vm1366, %v1345
      %1380 = vst.msk [vmem:[%s172 + $0x68] sm:$0xff] %vm1366, %v1351
      %1381 = vst.msk [vmem:[%s172 + $0x70] sm:$0xff] %vm1366, %v1357
      %1382 = vst.msk [vmem:[%s172 + $0x78] sm:$0xff] %vm1366, %v1363
      %s1383 = smul.u32 16, %s14
      %p1384 = scmp.lt.s32.totalorder %s1383, 31
      %s1385 = scalar_select %p1384, %s1383, 31
      %s1386 = smul.addr %s1385, 8
      %s1387 = scalar_lea.vmem %s3, %s1386
      // Predicated region
      $region33: #{tw_linear_fwd.1} parent=31 // pred_check
        %p1388 = pneg %p100
      $region34: #{tw_linear_fwd.1} parent=31 // pred_check_branch
        %1390 = sbr.rel (%p1388) target = $region36
      $region35: #{tw_linear_fwd.1} parent=31 // pred_region
        %s1391 = smul.u32 16, %s14
      $region36: #{tw_linear_fwd.1} parent=31 // pred_fallthru
        _
    $region32: #{tw_linear_fwd.1} parent=5 // pred_fallthru
      _
    %p1392 = scmp.le.s32.totalorder 2, %s9
    // Predicated region
    $region37: #{tw_linear_fwd.1} parent=5 // pred_check
      %p1393 = pneg %p1392
    $region38: #{tw_linear_fwd.1} parent=5 // pred_check_branch
      %1395 = sbr.rel (%p1393) target = $region40
    $region39: #{tw_linear_fwd.1} parent=5 // pred_region
      %s1396 = ssub.s32 %s9, 2
      // Predicated region
      $region41: #{tw_linear_fwd.1} parent=39 // pred_check
        %p1397 = pneg %p106
      $region42: #{tw_linear_fwd.1} parent=39 // pred_check_branch
        %1399 = sbr.rel (%p1397) target = $region44
      $region43: #{tw_linear_fwd.1} parent=39 // pred_region
        %s1400 = smul.u32 16, %s15
        %p1401 = scmp.lt.s32.totalorder %s1400, 31
        %s1402 = scalar_select %p1401, %s1400, 31
        %s1403 = smul.addr %s1402, 8
        %s1404 = scalar_lea.vmem %s3, %s1403
      $region44: #{tw_linear_fwd.1} parent=39 // pred_fallthru
        _
    $region40: #{tw_linear_fwd.1} parent=5 // pred_fallthru
      _
  $region6: #{tw_linear_fwd.1} parent=0 // loop_footer
    %s13 = sadd.s32 1, %s9
  $region7: #{tw_linear_fwd.1} parent=0 // loop_footer_branch
    %8 = sbr.rel target = $region3
  $region8: #{tw_linear_fwd.1} parent=0 // loop_exit
    _

</llo_original>
